<compile_context>
chip_gen: v6e
topology: v6e:2x2x1
jax: 0.10.0
libtpu: 0.0.40
codegen_flags: <defaults>
</compile_context>

<pallas_src>
import functools

import jax
import jax.numpy as jnp
from jax.experimental import pallas as pl
from jax.experimental.pallas import tpu as pltpu


def _pick_tile(dim: int, candidates) -> int:
    """Largest candidate tile that evenly divides `dim`; else the full dim."""
    for c in candidates:
        if dim >= c and dim % c == 0:
            return c
    return dim


def _precision_matmul_kernel(x_ref, w_ref, b_ref, o_ref, acc_ref):
    """One (tm, tn) output tile, accumulated over the K grid axis.

    x_ref  : (tm, tk)  bf16 (mixed precision) or f32 activations
    w_ref  : (tk, tn)  bf16 (mixed precision) or f32 weight tile
    b_ref  : (1, tn)   f32 bias tile
    o_ref  : (tm, tn)  f32 output tile (PrecisionModule always casts to f32)
    acc_ref: (tm, tn)  f32 VMEM accumulator scratch
    """
    k = pl.program_id(2)

    @pl.when(k == 0)
    def _():
        acc_ref[...] = jnp.zeros_like(acc_ref)

    # MXU matmul with f32 accumulation (matches torch autocast semantics).
    acc_ref[...] += jnp.dot(
        x_ref[...], w_ref[...], preferred_element_type=jnp.float32
    )

    @pl.when(k == pl.num_programs(2) - 1)
    def _():
        # Bias add once, in f32 (autocast keeps adds in f32); final
        # `.to(torch.float32)` of PrecisionModule.
        o_ref[...] = (acc_ref[...] + b_ref[...]).astype(jnp.float32)


def precision_module_forward(x, weight, bias, *, mixed_precision: bool = True):
    """Equivalent of PrecisionModule(inner_linear, device_type, mixed_precision)(x).

    x      : (B, S, H_in)  float32
    weight : (H_in, H_out) float32
    bias   : (H_out,)      float32
    returns: (B, S, H_out) float32  (the "last_hidden_state", cast to f32)
    """
    B, S, H_in = x.shape
    H_out = weight.shape[1]
    M, K, N = B * S, H_in, H_out

    x2d = x.reshape(M, K)
    b2d = bias.reshape(1, N).astype(jnp.float32)

    if mixed_precision:
        # torch.amp.autocast downcasts matmul operands to half precision.
        # Doing it in the wrapper (not in the kernel) halves HBM->VMEM DMA
        # bytes and removes the per-tile VPU cast.
        x2d = x2d.astype(jnp.bfloat16)
        w2d = weight.astype(jnp.bfloat16)
    else:
        w2d = weight.astype(jnp.float32)

    # Lane / MXU-aligned tiles when the shapes allow; full-dim blocks for the
    # tiny demo shapes (block_shape == full array dim is always legal).
    tm = _pick_tile(M, (256, 128, 64, 32, 16, 8))
    tn = _pick_tile(N, (512, 256, 128))
    tk = _pick_tile(K, (512, 256, 128))

    grid = (M // tm, N // tn, K // tk)

    in_bytes = 2 if mixed_precision else 4
    # Double-buffered inputs + double-buffered f32 output + f32 accumulator.
    tile_bytes = (
        2 * (tm * tk + tk * tn) * in_bytes
        + 2 * tm * tn * 4
        + tm * tn * 4
        + 2 * tn * 4
    )
    vmem_limit = max(32 * 1024 * 1024, 2 * tile_bytes)

    cost = pl.CostEstimate(
        flops=2 * M * N * K,
        transcendentals=0,
        bytes_accessed=(M * K + K * N) * in_bytes + N * 4 + M * N * 4,
    )

    out2d = pl.pallas_call(
        _precision_matmul_kernel,
        out_shape=jax.ShapeDtypeStruct((M, N), jnp.float32),
        grid=grid,
        in_specs=[
            pl.BlockSpec((tm, tk), lambda i, j, k: (i, k)),
            pl.BlockSpec((tk, tn), lambda i, j, k: (k, j)),
            pl.BlockSpec((1, tn), lambda i, j, k: (0, j)),
        ],
        out_specs=pl.BlockSpec((tm, tn), lambda i, j, k: (i, j)),
        scratch_shapes=[pltpu.VMEM((tm, tn), jnp.float32)],
        compiler_params=pltpu.CompilerParams(
            dimension_semantics=("parallel", "parallel", "arbitrary"),
            vmem_limit_bytes=int(vmem_limit),
        ),
        cost_estimate=cost,
    )(x2d, w2d, b2d)

    return out2d.reshape(B, S, N)


if __name__ == "__main__":
    # Small shapes implied by a transformer-style inner module.
    B, S, H = 2, 8, 32
    key = jax.random.PRNGKey(0)
    kx, kw, kb = jax.random.split(key, 3)

    x = jax.random.normal(kx, (B, S, H), dtype=jnp.float32)
    # Deterministic synthetic parameters (no checkpoint load).
    weight = jax.random.normal(kw, (H, H), dtype=jnp.float32) * 0.02
    bias = jax.random.normal(kb, (H,), dtype=jnp.float32) * 0.01

    # Mixed-precision (autocast) path.
    out_mp = precision_module_forward(x, weight, bias, mixed_precision=True)
    out_mp = jax.block_until_ready(out_mp)

    ref_mp = (
        jnp.dot(
            x.reshape(-1, H).astype(jnp.bfloat16),
            weight.astype(jnp.bfloat16),
            preferred_element_type=jnp.float32,
        )
        + bias[None, :]
    ).reshape(B, S, H).astype(jnp.float32)

    assert out_mp.dtype == jnp.float32
    assert out_mp.shape == (B, S, H)
    assert jnp.allclose(out_mp, ref_mp, atol=1e-5, rtol=1e-5)

    # Full-precision path (mixed_precision=False).
    out_fp = precision_module_forward(x, weight, bias, mixed_precision=False)
    out_fp = jax.block_until_ready(out_fp)
    ref_fp = (jnp.dot(x.reshape(-1, H), weight) + bias[None, :]).reshape(B, S, H)
    assert out_fp.dtype == jnp.float32
    assert jnp.allclose(out_fp, ref_fp, atol=1e-4, rtol=1e-4)

    # TODO(synk): BaseModelOutputWithPooling unwrapping and the autocast
    # context manager are Python-side constructs with no kernel equivalent;
    # the kernel returns last_hidden_state (f32) directly.
    print("KERNEL_OK")
</pallas_src>

<mosaic_0001>
module attributes {stable_mosaic.version = 11 : i64} {
  func.func @_precision_matmul_kernel(%arg0: i32, %arg1: i32, %arg2: i32, %arg3: memref<16x32xbf16, #tpu.memory_space<vmem>>, %arg4: memref<32x32xbf16, #tpu.memory_space<vmem>>, %arg5: memref<1x32xf32, #tpu.memory_space<vmem>>, %arg6: memref<16x32xf32, #tpu.memory_space<vmem>>, %arg7: memref<16x32xf32, #tpu.memory_space<vmem>>) attributes {dimension_semantics = [#tpu.dimension_semantics<parallel>, #tpu.dimension_semantics<parallel>, #tpu.dimension_semantics<arbitrary>], iteration_bounds = array<i64: 1, 1, 1>, scalar_prefetch = 0 : i64, scratch_operands = 1 : i64, tpu.core_type = #tpu.core_type<tc>, window_params = [{transform_indices = @transform_0, window_bounds = array<i64: 16, 32>}, {transform_indices = @transform_1, window_bounds = array<i64: 32, 32>}, {transform_indices = @transform_2, window_bounds = array<i64: 1, 32>}, {transform_indices = @transform_3, window_bounds = array<i64: 16, 32>}]} {
    %c0_i32 = arith.constant 0 : i32
    %0 = arith.cmpi eq, %arg2, %c0_i32 : i32
    %1 = arith.extui %0 : i1 to i32
    %c0_i32_0 = arith.constant 0 : i32
    %2 = arith.cmpi ne, %1, %c0_i32_0 : i32
    scf.if %2 {
      %cst_10 = arith.constant 0.000000e+00 : f32
      %12 = vector.broadcast %cst_10 : f32 to vector<16x32xf32>
      %c0_11 = arith.constant 0 : index
      %c0_12 = arith.constant 0 : index
      %13 = vector.load %arg7[%c0_11, %c0_12] : memref<16x32xf32, #tpu.memory_space<vmem>>, vector<16x32xf32>
      tpu.vector_store %arg7[%c0_11, %c0_12], %12 {strides = array<i32>} : memref<16x32xf32, #tpu.memory_space<vmem>>, vector<16x32xf32>,
    } else {
    }
    %c0 = arith.constant 0 : index
    %c0_1 = arith.constant 0 : index
    %3 = vector.load %arg7[%c0, %c0_1] : memref<16x32xf32, #tpu.memory_space<vmem>>, vector<16x32xf32>
    %c0_2 = arith.constant 0 : index
    %c0_3 = arith.constant 0 : index
    %4 = vector.load %arg3[%c0_2, %c0_3] : memref<16x32xbf16, #tpu.memory_space<vmem>>, vector<16x32xbf16>
    %c0_4 = arith.constant 0 : index
    %c0_5 = arith.constant 0 : index
    %5 = vector.load %arg4[%c0_4, %c0_5] : memref<32x32xbf16, #tpu.memory_space<vmem>>, vector<32x32xbf16>
    %cst = arith.constant dense<0.000000e+00> : vector<16x32xf32>
    %6 = tpu.matmul %4, %5, %cst {dimension_numbers = #tpu.dot_dimension_numbers<[1], [0], [0], [1], [0, 0, 1, 1], [], []>} : vector<16x32xbf16>, vector<32x32xbf16>, vector<16x32xf32> -> vector<16x32xf32>
    %7 = arith.addf %3, %6 : vector<16x32xf32>
    %c0_6 = arith.constant 0 : index
    %c0_7 = arith.constant 0 : index
    %8 = vector.load %arg7[%c0_6, %c0_7] : memref<16x32xf32, #tpu.memory_space<vmem>>, vector<16x32xf32>
    tpu.vector_store %arg7[%c0_6, %c0_7], %7 {strides = array<i32>} : memref<16x32xf32, #tpu.memory_space<vmem>>, vector<16x32xf32>,
    %c0_i32_8 = arith.constant 0 : i32
    %9 = arith.cmpi eq, %arg2, %c0_i32_8 : i32
    %10 = arith.extui %9 : i1 to i32
    %c0_i32_9 = arith.constant 0 : i32
    %11 = arith.cmpi ne, %10, %c0_i32_9 : i32
    scf.if %11 {
      %c0_10 = arith.constant 0 : index
      %c0_11 = arith.constant 0 : index
      %12 = vector.load %arg7[%c0_10, %c0_11] : memref<16x32xf32, #tpu.memory_space<vmem>>, vector<16x32xf32>
      %c0_12 = arith.constant 0 : index
      %c0_13 = arith.constant 0 : index
      %13 = vector.load %arg5[%c0_12, %c0_13] : memref<1x32xf32, #tpu.memory_space<vmem>>, vector<1x32xf32>
      %14 = vector.broadcast %13 : vector<1x32xf32> to vector<16x32xf32>
      %15 = arith.addf %12, %14 : vector<16x32xf32>
      %c0_14 = arith.constant 0 : index
      %c0_15 = arith.constant 0 : index
      %16 = vector.load %arg6[%c0_14, %c0_15] : memref<16x32xf32, #tpu.memory_space<vmem>>, vector<16x32xf32>
      tpu.vector_store %arg6[%c0_14, %c0_15], %15 {strides = array<i32>} : memref<16x32xf32, #tpu.memory_space<vmem>>, vector<16x32xf32>,
    } else {
    }
    return
  }
  func.func @transform_0(%arg0: i32, %arg1: i32, %arg2: i32) -> (i32, i32) {
    %c0_i32 = arith.constant 0 : i32
    return %arg0, %arg2 : i32, i32
  }
  func.func @transform_1(%arg0: i32, %arg1: i32, %arg2: i32) -> (i32, i32) {
    %c0_i32 = arith.constant 0 : i32
    return %arg2, %arg1 : i32, i32
  }
  func.func @transform_2(%arg0: i32, %arg1: i32, %arg2: i32) -> (i32, i32) {
    %c0_i32 = arith.constant 0 : i32
    %c0_i32_0 = arith.constant 0 : i32
    return %c0_i32, %arg1 : i32, i32
  }
  func.func @transform_3(%arg0: i32, %arg1: i32, %arg2: i32) -> (i32, i32) {
    %c0_i32 = arith.constant 0 : i32
    return %arg0, %arg1 : i32, i32
  }
}

</mosaic_0001>

<llo_original>
// kernel: tpu_custom_call.1
$region0: #{tpu_custom_call.1}
  #allocation0 [shape = 'u32[]', space=smem, size = 0x4, offset = 0x4, fixed_abs, tag = 'smem constant byte address 0x4 - core index']
  #allocation1 [shape = 'u32[144,128]{1,0:T(1,128)}', space=vmem, size = 0x12000, scoped, tag = 'internal scratch']
  #allocation2 [shape = 'f32[16,32]{1,0:T(8,128)}', space=vmem, size = 0x2000, scoped, tag = 'scratch operand']
  %s0 = inlined_call_operand.hbm [shape: bf16[16,32], index: 0, kind: input, shape index: {}]
  %s1 = inlined_call_operand.hbm [shape: bf16[32,32], index: 1, kind: input, shape index: {}]
  %s2 = inlined_call_operand.vmem [shape: f32[1,32], index: 2, kind: input, shape index: {}]
  %s3 = inlined_call_operand.hbm [shape: f32[16,32], index: 3, kind: output, shape index: {}]
  %s4 = sld [smem:[#allocation0]]
  $region38: #{tpu_custom_call.1} parent=0
    _
  %s6 = ssub.s32 1, %s4
  %s7 = scalar_select 0, %s6, %s4
  $region1: #{tpu_custom_call.1} parent=0
    #allocation3 [shape = 'u8[4096]{0}', space=vmem, size = 0x1000, scoped, tag = 'input window, operand 0, single buffered']
    #allocation4 [shape = 's32[1]{0}', space=sflag, size = 0x4, scoped, tag = 'scoped memory for tpu_custom_call.1']
    #allocation5 [shape = 's32[1]{0}', space=sflag, size = 0x4, scoped, tag = 'scoped memory for tpu_custom_call.1']
    #allocation6 [shape = 'u8[8192]{0}', space=vmem, size = 0x2000, scoped, tag = 'input window, operand 1, single buffered']
    #allocation7 [shape = 's32[1]{0}', space=sflag, size = 0x4, scoped, tag = 'scoped memory for tpu_custom_call.1']
    #allocation8 [shape = 'u8[8192]{0}', space=vmem, size = 0x2000, scoped, tag = 'output window, operand 0, single buffered']
    %8 = vsyncpa [#allocation4], 0
    %9 = vsyncpa [#allocation7], 0
    %10 = vsyncpa [#allocation5], 0
    // Predicated region
    $region2: #{tpu_custom_call.1} parent=1 // pred_check
      _
    $region3: #{tpu_custom_call.1} parent=1 // pred_check_branch
      %12 = sbr.rel (0) target = $region5
    $region4: #{tpu_custom_call.1} parent=1 // pred_region
      %s14 = ssub.s32 128, 128
      %15 = vsyncadd [#allocation4], %s14
      %s16 = sshll.u32 [#allocation3], 4
      %s17 = int_to_ptr.vmem [resolvable:$true] %s16
      %22 = dma.hbm_to_vmem [thread:$0]  %s0, 128, %s17, [#allocation4], 64, 64, 4
    $region5: #{tpu_custom_call.1} parent=1 // pred_fallthru
      _
    // Predicated region
    $region6: #{tpu_custom_call.1} parent=1 // pred_check
      _
    $region7: #{tpu_custom_call.1} parent=1 // pred_check_branch
      %24 = sbr.rel (0) target = $region9
    $region8: #{tpu_custom_call.1} parent=1 // pred_region
      %s26 = ssub.s32 256, 256
      %27 = vsyncadd [#allocation7], %s26
      %s28 = sshll.u32 [#allocation6], 4
      %s29 = int_to_ptr.vmem [resolvable:$true] %s28
      %34 = dma.hbm_to_vmem [thread:$0]  %s1, 256, %s29, [#allocation7], 64, 64, 4
    $region9: #{tpu_custom_call.1} parent=1 // pred_fallthru
      _
    // Predicated region
    $region10: #{tpu_custom_call.1} parent=1 // pred_check
      _
    $region11: #{tpu_custom_call.1} parent=1 // pred_check_branch
      %36 = sbr.rel (0) target = $region13
    $region12: #{tpu_custom_call.1} parent=1 // pred_region
      _
    $region13: #{tpu_custom_call.1} parent=1 // pred_fallthru
      _
    // Predicated region
    $region14: #{tpu_custom_call.1} parent=1 // pred_check
      _
    $region15: #{tpu_custom_call.1} parent=1 // pred_check_branch
      %38 = sbr.rel (0) target = $region17
    $region16: #{tpu_custom_call.1} parent=1 // pred_region
      %39 = dma.done [#allocation4], 128
    $region17: #{tpu_custom_call.1} parent=1 // pred_fallthru
      _
    // Predicated region
    $region18: #{tpu_custom_call.1} parent=1 // pred_check
      _
    $region19: #{tpu_custom_call.1} parent=1 // pred_check_branch
      %41 = sbr.rel (0) target = $region21
    $region20: #{tpu_custom_call.1} parent=1 // pred_region
      %42 = dma.done [#allocation7], 256
    $region21: #{tpu_custom_call.1} parent=1 // pred_fallthru
      _
    %p44 = scmp.eq.s32.totalorder 0, 0
    // Predicated region
    $region22: #{tpu_custom_call.1} parent=1 // pred_check
      %p45 = pneg %p44
    $region23: #{tpu_custom_call.1} parent=1 // pred_check_branch
      %47 = sbr.rel (%p45) target = $region25
    $region24: #{tpu_custom_call.1} parent=1 // pred_region
      %vm48 = vcmask 261120
      %49 = vst.msk [vmem:[#allocation2] sm:$0xff] %vm48, 0.0
      %50 = vst.msk [vmem:[#allocation2 + $0x8] sm:$0xff] %vm48, 0.0
    $region25: #{tpu_custom_call.1} parent=1 // pred_fallthru
      _
    %v51 = vld [vmem:[#allocation2] sm:$0xff]
    %v52 = vld [vmem:[#allocation2 + $0x8] sm:$0xff]
    %v53 = vld [vmem:[#allocation3] sm:$0xf]
    %v54 = vld [vmem:[#allocation3 + $0x4] sm:$0xf]
    %v55 = vld [vmem:[#allocation6] sm:$0xf]
    %v56 = vld [vmem:[#allocation6 + $0x4] sm:$0xf]
    %v57 = vld [vmem:[#allocation6 + $0x8] sm:$0xf]
    %v58 = vld [vmem:[#allocation6 + $0xc] sm:$0xf]
    %v61 = vunpack.c.l.b16 %v53
    %v62 = vunpack.c.l.b16 %v54
    %v63 = vpack.c.b16 %v62, %v61
    %v68 = vunpack.c.l.b16 %v55
    %v69 = vunpack.c.l.b16 %v56
    %v70 = vunpack.c.l.b16 %v57
    %v71 = vunpack.c.l.b16 %v58
    %v72 = vpack.c.b16 %v69, %v68
    %v73 = vpack.c.b16 %v71, %v70
    %vm76 = vcmask 261120
    %v78 = vsel %vm76, %v63, 0
    %80 = vmatprep.subr.bf16.mxu0 0
    %81 = vmatpush1.bf16.msra.mxu0 0
    %82 = vmatprep.subr.bf16.mxu0 0
    %83 = vmatpush1.bf16.msra.mxu0 0
    %84 = vmatprep.subr.bf16.mxu0 0
    %85 = vmatpush1.bf16.msra.mxu0 0
    %86 = vmatprep.subr.bf16.mxu0 0
    %87 = vmatpush1.bf16.msra.mxu0 0
    %88 = vmatprep.subr.bf16.mxu0 0
    %89 = vmatpush1.bf16.msra.mxu0 0
    %90 = vmatprep.subr.bf16.mxu0 0
    %91 = vmatpush1.bf16.msra.mxu0 0
    %92 = vmatprep.subr.bf16.mxu0 0
    %93 = vmatpush1.bf16.msra.mxu0 %v73
    %94 = vmatprep.subr.bf16.mxu0 0
    %95 = vmatpush1.bf16.msra.mxu0 %v72
    %96 = vmatprep.subr.bf16.mxu0 0
    %97 = vmatpush2.bf16.msra.mxu0 0
    %98 = vmatprep.subr.bf16.mxu0 0
    %99 = vmatpush2.bf16.msra.mxu0 0
    %100 = vmatprep.subr.bf16.mxu0 0
    %101 = vmatpush2.bf16.msra.mxu0 0
    %102 = vmatprep.subr.bf16.mxu0 0
    %103 = vmatpush2.bf16.msra.mxu0 0
    %104 = vmatprep.subr.bf16.mxu0 0
    %105 = vmatpush2.bf16.msra.mxu0 0
    %106 = vmatprep.subr.bf16.mxu0 0
    %107 = vmatpush2.bf16.msra.mxu0 0
    %108 = vmatprep.subr.bf16.mxu0 0
    %109 = vmatpush2.bf16.msra.mxu0 0
    %110 = vmatprep.subr.bf16.mxu0 0
    %111 = vmatpush2.bf16.msra.mxu0 0
    %112 = vmatprep.mubr.bf16.mxu0 0
    %113 = vmatmul.mubr.bf16.gmra.mxu0 %v78
    %v114 = vpop.f32.mrf.mxu0
    %v115 = vadd.f32 0.0, %v114
    %v116 = vpop.f32.mrf.mxu0
    %v117 = vpop.f32.mrf.mxu0
    %v118 = vadd.f32 0.0, %v117
    %v119 = vpop.f32.mrf.mxu0
    %120 = vdwg.mxu0
    %v121 = vadd.f32 %v51, %v115
    %v122 = vadd.f32 %v52, %v118
    %123 = vst.msk [vmem:[#allocation2] sm:$0xff] %vm76, %v121
    %124 = vst.msk [vmem:[#allocation2 + $0x8] sm:$0xff] %vm76, %v122
    // Predicated region
    $region26: #{tpu_custom_call.1} parent=1 // pred_check
      %p125 = pneg %p44
    $region27: #{tpu_custom_call.1} parent=1 // pred_check_branch
      %127 = sbr.rel (%p125) target = $region29
    $region28: #{tpu_custom_call.1} parent=1 // pred_region
      %v128 = vld [vmem:[#allocation2] sm:$0xff]
      %v129 = vld [vmem:[#allocation2 + $0x8] sm:$0xff]
      %v130 = vld [vmem:[%s2] sm:$0x1]
      %v132 = vlaneseq
      %v133 = vshrl.u32 %v132, 7
      %v134 = vsub.s32 0, %v133
      %v135 = vrot.slane %v130, %v134
      %v137 = vadd.f32 %v128, %v135
      %v138 = vadd.f32 %v129, %v135
      %139 = vst.msk [vmem:[#allocation8] sm:$0xff] %vm76, %v137
      %140 = vst.msk [vmem:[#allocation8 + $0x8] sm:$0xff] %vm76, %v138
    $region29: #{tpu_custom_call.1} parent=1 // pred_fallthru
      _
    // Predicated region
    $region30: #{tpu_custom_call.1} parent=1 // pred_check
      _
    $region31: #{tpu_custom_call.1} parent=1 // pred_check_branch
      %142 = sbr.rel (0) target = $region33
    $region32: #{tpu_custom_call.1} parent=1 // pred_region
      %s144 = ssub.s32 256, 256
      %145 = vsyncadd [#allocation5], %s144
      %s146 = sshll.u32 [#allocation8], 4
      %s147 = int_to_ptr.vmem [resolvable:$true] %s146
      %152 = dma.vmem_to_hbm [thread:$0]  %s147, 256, %s3, [#allocation5], 128, 128, 8
    $region33: #{tpu_custom_call.1} parent=1 // pred_fallthru
      _
    // Predicated region
    $region34: #{tpu_custom_call.1} parent=1 // pred_check
      _
    $region35: #{tpu_custom_call.1} parent=1 // pred_check_branch
      %154 = sbr.rel (0) target = $region37
    $region36: #{tpu_custom_call.1} parent=1 // pred_region
      %155 = dma.done [#allocation5], 256
    $region37: #{tpu_custom_call.1} parent=1 // pred_fallthru
      _
    %156 = vsyncpa [#allocation4], 1
    %157 = vsyncpa [#allocation7], 1
    %158 = vsyncpa [#allocation5], 1

</llo_original>
